<compile_context>
chip_gen: v7x
topology: tpu7x:2x2x1
jax: 0.10.0
libtpu: 0.0.40
codegen_flags: <defaults>
</compile_context>

<pallas_src>
import jax
import jax.numpy as jnp
from jax.experimental import pallas as pl
from jax.experimental.pallas import tpu as pltpu


def _round_up(n, m):
    return ((n + m - 1) // m) * m


# ------------------------------- Pallas kernel ------------------------------ #

def _shared_bottom_kernel(x_ref, w1_ref, b1_ref, w2_ref, b2_ref,
                          wd_ref, bd_ref, out_ref):
    """Fused encoder (2x Linear+ReLU) + all task heads as one (E, TO_pad) matmul."""
    x = x_ref[...]                                                  # (bb, D) bf16
    # encoder layer 1
    h = jnp.dot(x, w1_ref[...], preferred_element_type=jnp.float32)
    h = jnp.maximum(h + b1_ref[...], 0.0)                           # (bb, H) f32
    # encoder layer 2 -> shared embedding (stays in VMEM, never to HBM)
    e = jnp.dot(h.astype(w2_ref.dtype), w2_ref[...],
                preferred_element_type=jnp.float32)
    e = jnp.maximum(e + b2_ref[...], 0.0)                           # (bb, E) f32
    # all task decoders at once: (bb, E) @ (E, TO_pad), lane-dense output slab
    y = jnp.dot(e.astype(wd_ref.dtype), wd_ref[...],
                preferred_element_type=jnp.float32)
    out_ref[...] = (y + bd_ref[...]).astype(out_ref.dtype)          # (bb, TO_pad)


# ---------------------------- one-time param prep ---------------------------- #

def prepare_params(params):
    """Hoisted preprocessing: concat/pad the task heads, cast weights to bf16.

    Call once; the per-call path only casts x.
    """
    w1, b1, w2, b2, dec_w, dec_b = (
        params["w1"], params["b1"], params["w2"], params["b2"],
        params["dec_w"], params["dec_b"],
    )
    D, H = w1.shape
    E = w2.shape[1]
    T, _, O = dec_w.shape
    TO = T * O
    TO_pad = _round_up(max(TO, 1), 128)     # lane-dense output width

    # Concatenate T task heads into one (E, T*O) slab, zero-pad lanes to TO_pad.
    wd = jnp.transpose(dec_w, (1, 0, 2)).reshape(E, TO)
    bd = dec_b.reshape(1, TO)
    wd = jnp.pad(wd, ((0, 0), (0, TO_pad - TO)))
    bd = jnp.pad(bd, ((0, 0), (0, TO_pad - TO)))

    bf16 = jnp.bfloat16
    prepped = {
        "w1": w1.astype(bf16), "b1": b1.astype(jnp.float32),
        "w2": w2.astype(bf16), "b2": b2.astype(jnp.float32),
        "wd": wd.astype(bf16), "bd": bd.astype(jnp.float32),
    }
    meta = dict(D=D, H=H, E=E, T=T, O=O, TO=TO, TO_pad=TO_pad)
    return prepped, meta


# ------------------------------ Python wrapper ------------------------------ #

def _vmem_capacity_bytes():
    try:
        return int(pltpu.get_tpu_info().vmem_capacity_bytes)
    except Exception:
        return 64 * 1024 * 1024          # conservative (v7x per-TC VMEM)


def _pick_batch_tile(B, D, H, E, TO_pad, vmem_cap):
    """Largest batch tile whose estimated VMEM footprint fits the budget."""
    budget = int(vmem_cap * 0.6)         # headroom for compiler internals
    # single-buffered resident weights + f32 biases
    weight_bytes = (D * H + H * E + E * TO_pad) * 2 + (H + E + TO_pad) * 4
    bb = 8
    for cand in (2048, 1024, 512, 256, 128, 64, 32, 16, 8):
        stream = 2 * cand * D * 2 + 2 * cand * TO_pad * 4   # dbl-buffered x / out
        live = 3 * cand * max(H, E, TO_pad) * 4             # f32 intermediates
        if weight_bytes + stream + live <= budget:
            bb = cand
            break
    # NOTE: if even bb=8 does not fit (H,E >= ~4k on v7x), the right fix is a
    # reduction grid axis over H/E with an f32 VMEM accumulator (not done here).
    if bb >= B:
        bb = B                           # full-array block (any B allowed)
    if B >= 16 and pl.cdiv(B, bb) < 2:
        # >=2 grid steps so "parallel" actually shards across both v7x TCs
        bb = max(8, 8 * pl.cdiv(pl.cdiv(B, 2), 8))
    return bb


def _weight_spec(shape):
    """Grid-invariant (resident) operand: single-buffered if supported."""
    idx = lambda i: tuple(0 for _ in shape)
    try:
        return pl.BlockSpec(shape, idx, pipeline_mode=pl.Buffered(1))
    except Exception:
        return pl.BlockSpec(shape, idx)


def _run_pallas(x_bf, prepped, B, bb, D, H, E, TO_pad, vmem_limit,
                single_buffer_weights=True):
    nb = pl.cdiv(B, bb)
    wspec = _weight_spec if single_buffer_weights else (
        lambda shape: pl.BlockSpec(shape, lambda i: tuple(0 for _ in shape)))
    return pl.pallas_call(
        _shared_bottom_kernel,
        out_shape=jax.ShapeDtypeStruct((B, TO_pad), jnp.float32),
        grid_spec=pl.GridSpec(
            grid=(nb,),
            in_specs=[
                pl.BlockSpec((bb, D), lambda i: (i, 0)),   # x (streamed)
                wspec((D, H)),                             # W1 (resident)
                wspec((1, H)),                             # b1
                wspec((H, E)),                             # W2 (resident)
                wspec((1, E)),                             # b2
                wspec((E, TO_pad)),                        # fused decoder W
                wspec((1, TO_pad)),                        # fused decoder b
            ],
            out_specs=pl.BlockSpec((bb, TO_pad), lambda i: (i, 0)),
        ),
        compiler_params=pltpu.CompilerParams(
            dimension_semantics=("parallel",),
            vmem_limit_bytes=vmem_limit),
    )(x_bf, prepped["w1"], prepped["b1"], prepped["w2"], prepped["b2"],
      prepped["wd"], prepped["bd"])


def shared_bottom_forward(x, prepped, meta):
    """x: (B, D) float32. Returns list of num_tasks arrays of shape (B, O)."""
    B, D = x.shape
    H, E = meta["H"], meta["E"]
    T, O, TO, TO_pad = meta["T"], meta["O"], meta["TO"], meta["TO_pad"]

    vmem_cap = _vmem_capacity_bytes()
    bb = _pick_batch_tile(B, D, H, E, TO_pad, vmem_cap)
    vmem_limit = min(int(vmem_cap * 0.85), 100 * 1024 * 1024)

    x_bf = x.astype(jnp.bfloat16)        # only per-call cast

    try:
        out = _run_pallas(x_bf, prepped, B, bb, D, H, E, TO_pad, vmem_limit,
                          single_buffer_weights=True)
    except Exception:
        # Fallback if pipeline_mode=pl.Buffered(1) is unsupported in this JAX.
        out = _run_pallas(x_bf, prepped, B, bb, D, H, E, TO_pad, vmem_limit,
                          single_buffer_weights=False)

    out = out[:, :TO]                    # drop lane padding (garbage zeros)
    # SharedBottom.forward returns a python list of per-task outputs.
    return jnp.split(out, T, axis=1)


# ------------------------------ setup / checks ------------------------------ #

def init_params(key, in_dim, hidden, embed, out_dim, num_tasks):
    ks = jax.random.split(key, 6)
    s1 = 1.0 / jnp.sqrt(in_dim)
    s2 = 1.0 / jnp.sqrt(hidden)
    s3 = 1.0 / jnp.sqrt(embed)
    return {
        "w1": jax.random.uniform(ks[0], (in_dim, hidden), jnp.float32, -s1, s1),
        "b1": jax.random.uniform(ks[1], (1, hidden), jnp.float32, -s1, s1),
        "w2": jax.random.uniform(ks[2], (hidden, embed), jnp.float32, -s2, s2),
        "b2": jax.random.uniform(ks[3], (1, embed), jnp.float32, -s2, s2),
        "dec_w": jax.random.uniform(ks[4], (num_tasks, embed, out_dim),
                                    jnp.float32, -s3, s3),
        "dec_b": jax.random.uniform(ks[5], (num_tasks, 1, out_dim),
                                    jnp.float32, -s3, s3),
    }


def reference_forward(x, params):
    """Pure-JAX reference mirroring the kernel's bf16 matmul operands."""
    bf = lambda a: a.astype(jnp.bfloat16)
    h = jnp.maximum(
        jnp.dot(bf(x), bf(params["w1"]), preferred_element_type=jnp.float32)
        + params["b1"], 0.0)
    e = jnp.maximum(
        jnp.dot(bf(h), bf(params["w2"]), preferred_element_type=jnp.float32)
        + params["b2"], 0.0)
    return [
        jnp.dot(bf(e), bf(params["dec_w"][t]), preferred_element_type=jnp.float32)
        + params["dec_b"][t]
        for t in range(params["dec_w"].shape[0])
    ]


if __name__ == "__main__":
    B, D, H, E, O, T = 8, 32, 128, 128, 8, 3

    key = jax.random.PRNGKey(0)
    kx, kp = jax.random.split(key)
    x = jax.random.normal(kx, (B, D), jnp.float32)
    params = init_params(kp, D, H, E, O, T)

    prepped, meta = prepare_params(params)          # one-time weight prep
    outs = shared_bottom_forward(x, prepped, meta)
    outs = [jax.block_until_ready(o) for o in outs]

    refs = reference_forward(x, params)
    for o, r in zip(outs, refs):
        assert o.shape == (B, O)
        assert jnp.allclose(o, r, atol=2e-2, rtol=2e-2), float(
            jnp.max(jnp.abs(o - r)))

    print("KERNEL_OK")
</pallas_src>

<mosaic_0001>
module attributes {stable_mosaic.version = 11 : i64} {
  func.func @_shared_bottom_kernel(%arg0: i32, %arg1: memref<8x32xbf16, #tpu.memory_space<vmem>>, %arg2: memref<32x128xbf16, #tpu.memory_space<vmem>>, %arg3: memref<1x128xf32, #tpu.memory_space<vmem>>, %arg4: memref<128x128xbf16, #tpu.memory_space<vmem>>, %arg5: memref<1x128xf32, #tpu.memory_space<vmem>>, %arg6: memref<128x128xbf16, #tpu.memory_space<vmem>>, %arg7: memref<1x128xf32, #tpu.memory_space<vmem>>, %arg8: memref<8x128xf32, #tpu.memory_space<vmem>>) attributes {dimension_semantics = [#tpu.dimension_semantics<parallel>], iteration_bounds = array<i64: 1>, scalar_prefetch = 0 : i64, scratch_operands = 0 : i64, tpu.core_type = #tpu.core_type<tc>, window_params = [{transform_indices = @transform_0, window_bounds = array<i64: 8, 32>}, {pipeline_mode = #tpu.pipeline_mode<synchronous>, transform_indices = @transform_1, window_bounds = array<i64: 32, 128>}, {pipeline_mode = #tpu.pipeline_mode<synchronous>, transform_indices = @transform_2, window_bounds = array<i64: 1, 128>}, {pipeline_mode = #tpu.pipeline_mode<synchronous>, transform_indices = @transform_3, window_bounds = array<i64: 128, 128>}, {pipeline_mode = #tpu.pipeline_mode<synchronous>, transform_indices = @transform_4, window_bounds = array<i64: 1, 128>}, {pipeline_mode = #tpu.pipeline_mode<synchronous>, transform_indices = @transform_5, window_bounds = array<i64: 128, 128>}, {pipeline_mode = #tpu.pipeline_mode<synchronous>, transform_indices = @transform_6, window_bounds = array<i64: 1, 128>}, {transform_indices = @transform_7, window_bounds = array<i64: 8, 128>}]} {
    %c0 = arith.constant 0 : index
    %c0_0 = arith.constant 0 : index
    %0 = vector.load %arg1[%c0, %c0_0] : memref<8x32xbf16, #tpu.memory_space<vmem>>, vector<8x32xbf16>
    %c0_1 = arith.constant 0 : index
    %c0_2 = arith.constant 0 : index
    %1 = vector.load %arg2[%c0_1, %c0_2] : memref<32x128xbf16, #tpu.memory_space<vmem>>, vector<32x128xbf16>
    %cst = arith.constant dense<0.000000e+00> : vector<8x128xf32>
    %2 = tpu.matmul %0, %1, %cst {dimension_numbers = #tpu.dot_dimension_numbers<[1], [0], [0], [1], [0, 0, 1, 1], [], []>} : vector<8x32xbf16>, vector<32x128xbf16>, vector<8x128xf32> -> vector<8x128xf32>
    %c0_3 = arith.constant 0 : index
    %c0_4 = arith.constant 0 : index
    %3 = vector.load %arg3[%c0_3, %c0_4] : memref<1x128xf32, #tpu.memory_space<vmem>>, vector<1x128xf32>
    %4 = vector.broadcast %3 : vector<1x128xf32> to vector<8x128xf32>
    %5 = arith.addf %2, %4 : vector<8x128xf32>
    %cst_5 = arith.constant 0.000000e+00 : f32
    %6 = vector.broadcast %cst_5 : f32 to vector<8x128xf32>
    %7 = arith.maximumf %5, %6 : vector<8x128xf32>
    %8 = arith.truncf %7 : vector<8x128xf32> to vector<8x128xbf16>
    %c0_6 = arith.constant 0 : index
    %c0_7 = arith.constant 0 : index
    %9 = vector.load %arg4[%c0_6, %c0_7] : memref<128x128xbf16, #tpu.memory_space<vmem>>, vector<128x128xbf16>
    %cst_8 = arith.constant dense<0.000000e+00> : vector<8x128xf32>
    %10 = tpu.matmul %8, %9, %cst_8 {dimension_numbers = #tpu.dot_dimension_numbers<[1], [0], [0], [1], [0, 0, 1, 1], [], []>} : vector<8x128xbf16>, vector<128x128xbf16>, vector<8x128xf32> -> vector<8x128xf32>
    %c0_9 = arith.constant 0 : index
    %c0_10 = arith.constant 0 : index
    %11 = vector.load %arg5[%c0_9, %c0_10] : memref<1x128xf32, #tpu.memory_space<vmem>>, vector<1x128xf32>
    %12 = vector.broadcast %11 : vector<1x128xf32> to vector<8x128xf32>
    %13 = arith.addf %10, %12 : vector<8x128xf32>
    %cst_11 = arith.constant 0.000000e+00 : f32
    %14 = vector.broadcast %cst_11 : f32 to vector<8x128xf32>
    %15 = arith.maximumf %13, %14 : vector<8x128xf32>
    %16 = arith.truncf %15 : vector<8x128xf32> to vector<8x128xbf16>
    %c0_12 = arith.constant 0 : index
    %c0_13 = arith.constant 0 : index
    %17 = vector.load %arg6[%c0_12, %c0_13] : memref<128x128xbf16, #tpu.memory_space<vmem>>, vector<128x128xbf16>
    %cst_14 = arith.constant dense<0.000000e+00> : vector<8x128xf32>
    %18 = tpu.matmul %16, %17, %cst_14 {dimension_numbers = #tpu.dot_dimension_numbers<[1], [0], [0], [1], [0, 0, 1, 1], [], []>} : vector<8x128xbf16>, vector<128x128xbf16>, vector<8x128xf32> -> vector<8x128xf32>
    %c0_15 = arith.constant 0 : index
    %c0_16 = arith.constant 0 : index
    %19 = vector.load %arg7[%c0_15, %c0_16] : memref<1x128xf32, #tpu.memory_space<vmem>>, vector<1x128xf32>
    %20 = vector.broadcast %19 : vector<1x128xf32> to vector<8x128xf32>
    %21 = arith.addf %18, %20 : vector<8x128xf32>
    %c0_17 = arith.constant 0 : index
    %c0_18 = arith.constant 0 : index
    %22 = vector.load %arg8[%c0_17, %c0_18] : memref<8x128xf32, #tpu.memory_space<vmem>>, vector<8x128xf32>
    tpu.vector_store %arg8[%c0_17, %c0_18], %21 {strides = array<i32>} : memref<8x128xf32, #tpu.memory_space<vmem>>, vector<8x128xf32>,
    return
  }
  func.func @transform_0(%arg0: i32) -> (i32, i32) {
    %c0_i32 = arith.constant 0 : i32
    %c0_i32_0 = arith.constant 0 : i32
    return %arg0, %c0_i32 : i32, i32
  }
  func.func @transform_1(%arg0: i32) -> (i32, i32) {
    %c0_i32 = arith.constant 0 : i32
    %c0_i32_0 = arith.constant 0 : i32
    %c0_i32_1 = arith.constant 0 : i32
    return %c0_i32, %c0_i32_0 : i32, i32
  }
  func.func @transform_2(%arg0: i32) -> (i32, i32) {
    %c0_i32 = arith.constant 0 : i32
    %c0_i32_0 = arith.constant 0 : i32
    %c0_i32_1 = arith.constant 0 : i32
    return %c0_i32, %c0_i32_0 : i32, i32
  }
  func.func @transform_3(%arg0: i32) -> (i32, i32) {
    %c0_i32 = arith.constant 0 : i32
    %c0_i32_0 = arith.constant 0 : i32
    %c0_i32_1 = arith.constant 0 : i32
    return %c0_i32, %c0_i32_0 : i32, i32
  }
  func.func @transform_4(%arg0: i32) -> (i32, i32) {
    %c0_i32 = arith.constant 0 : i32
    %c0_i32_0 = arith.constant 0 : i32
    %c0_i32_1 = arith.constant 0 : i32
    return %c0_i32, %c0_i32_0 : i32, i32
  }
  func.func @transform_5(%arg0: i32) -> (i32, i32) {
    %c0_i32 = arith.constant 0 : i32
    %c0_i32_0 = arith.constant 0 : i32
    %c0_i32_1 = arith.constant 0 : i32
    return %c0_i32, %c0_i32_0 : i32, i32
  }
  func.func @transform_6(%arg0: i32) -> (i32, i32) {
    %c0_i32 = arith.constant 0 : i32
    %c0_i32_0 = arith.constant 0 : i32
    %c0_i32_1 = arith.constant 0 : i32
    return %c0_i32, %c0_i32_0 : i32, i32
  }
  func.func @transform_7(%arg0: i32) -> (i32, i32) {
    %c0_i32 = arith.constant 0 : i32
    %c0_i32_0 = arith.constant 0 : i32
    return %arg0, %c0_i32 : i32, i32
  }
}

module attributes {stable_mosaic.version = 11 : i64} {
  func.func @_shared_bottom_kernel(%arg0: i32, %arg1: memref<8x32xbf16, #tpu.memory_space<vmem>>, %arg2: memref<32x128xbf16, #tpu.memory_space<vmem>>, %arg3: memref<1x128xf32, #tpu.memory_space<vmem>>, %arg4: memref<128x128xbf16, #tpu.memory_space<vmem>>, %arg5: memref<1x128xf32, #tpu.memory_space<vmem>>, %arg6: memref<128x128xbf16, #tpu.memory_space<vmem>>, %arg7: memref<1x128xf32, #tpu.memory_space<vmem>>, %arg8: memref<8x128xf32, #tpu.memory_space<vmem>>) attributes {dimension_semantics = [#tpu.dimension_semantics<parallel>], iteration_bounds = array<i64: 1>, scalar_prefetch = 0 : i64, scratch_operands = 0 : i64, tpu.core_type = #tpu.core_type<tc>, window_params = [{transform_indices = @transform_0, window_bounds = array<i64: 8, 32>}, {pipeline_mode = #tpu.pipeline_mode<synchronous>, transform_indices = @transform_1, window_bounds = array<i64: 32, 128>}, {pipeline_mode = #tpu.pipeline_mode<synchronous>, transform_indices = @transform_2, window_bounds = array<i64: 1, 128>}, {pipeline_mode = #tpu.pipeline_mode<synchronous>, transform_indices = @transform_3, window_bounds = array<i64: 128, 128>}, {pipeline_mode = #tpu.pipeline_mode<synchronous>, transform_indices = @transform_4, window_bounds = array<i64: 1, 128>}, {pipeline_mode = #tpu.pipeline_mode<synchronous>, transform_indices = @transform_5, window_bounds = array<i64: 128, 128>}, {pipeline_mode = #tpu.pipeline_mode<synchronous>, transform_indices = @transform_6, window_bounds = array<i64: 1, 128>}, {transform_indices = @transform_7, window_bounds = array<i64: 8, 128>}]} {
    %c0 = arith.constant 0 : index
    %c0_0 = arith.constant 0 : index
    %0 = vector.load %arg1[%c0, %c0_0] : memref<8x32xbf16, #tpu.memory_space<vmem>>, vector<8x32xbf16>
    %c0_1 = arith.constant 0 : index
    %c0_2 = arith.constant 0 : index
    %1 = vector.load %arg2[%c0_1, %c0_2] : memref<32x128xbf16, #tpu.memory_space<vmem>>, vector<32x128xbf16>
    %cst = arith.constant dense<0.000000e+00> : vector<8x128xf32>
    %2 = tpu.matmul %0, %1, %cst {dimension_numbers = #tpu.dot_dimension_numbers<[1], [0], [0], [1], [0, 0, 1, 1], [], []>} : vector<8x32xbf16>, vector<32x128xbf16>, vector<8x128xf32> -> vector<8x128xf32>
    %c0_3 = arith.constant 0 : index
    %c0_4 = arith.constant 0 : index
    %3 = vector.load %arg3[%c0_3, %c0_4] : memref<1x128xf32, #tpu.memory_space<vmem>>, vector<1x128xf32>
    %4 = vector.broadcast %3 : vector<1x128xf32> to vector<8x128xf32>
    %5 = arith.addf %2, %4 : vector<8x128xf32>
    %cst_5 = arith.constant 0.000000e+00 : f32
    %6 = vector.broadcast %cst_5 : f32 to vector<8x128xf32>
    %7 = arith.maximumf %5, %6 : vector<8x128xf32>
    %8 = arith.truncf %7 : vector<8x128xf32> to vector<8x128xbf16>
    %c0_6 = arith.constant 0 : index
    %c0_7 = arith.constant 0 : index
    %9 = vector.load %arg4[%c0_6, %c0_7] : memref<128x128xbf16, #tpu.memory_space<vmem>>, vector<128x128xbf16>
    %cst_8 = arith.constant dense<0.000000e+00> : vector<8x128xf32>
    %10 = tpu.matmul %8, %9, %cst_8 {dimension_numbers = #tpu.dot_dimension_numbers<[1], [0], [0], [1], [0, 0, 1, 1], [], []>} : vector<8x128xbf16>, vector<128x128xbf16>, vector<8x128xf32> -> vector<8x128xf32>
    %c0_9 = arith.constant 0 : index
    %c0_10 = arith.constant 0 : index
    %11 = vector.load %arg5[%c0_9, %c0_10] : memref<1x128xf32, #tpu.memory_space<vmem>>, vector<1x128xf32>
    %12 = vector.broadcast %11 : vector<1x128xf32> to vector<8x128xf32>
    %13 = arith.addf %10, %12 : vector<8x128xf32>
    %cst_11 = arith.constant 0.000000e+00 : f32
    %14 = vector.broadcast %cst_11 : f32 to vector<8x128xf32>
    %15 = arith.maximumf %13, %14 : vector<8x128xf32>
    %16 = arith.truncf %15 : vector<8x128xf32> to vector<8x128xbf16>
    %c0_12 = arith.constant 0 : index
    %c0_13 = arith.constant 0 : index
    %17 = vector.load %arg6[%c0_12, %c0_13] : memref<128x128xbf16, #tpu.memory_space<vmem>>, vector<128x128xbf16>
    %cst_14 = arith.constant dense<0.000000e+00> : vector<8x128xf32>
    %18 = tpu.matmul %16, %17, %cst_14 {dimension_numbers = #tpu.dot_dimension_numbers<[1], [0], [0], [1], [0, 0, 1, 1], [], []>} : vector<8x128xbf16>, vector<128x128xbf16>, vector<8x128xf32> -> vector<8x128xf32>
    %c0_15 = arith.constant 0 : index
    %c0_16 = arith.constant 0 : index
    %19 = vector.load %arg7[%c0_15, %c0_16] : memref<1x128xf32, #tpu.memory_space<vmem>>, vector<1x128xf32>
    %20 = vector.broadcast %19 : vector<1x128xf32> to vector<8x128xf32>
    %21 = arith.addf %18, %20 : vector<8x128xf32>
    %c0_17 = arith.constant 0 : index
    %c0_18 = arith.constant 0 : index
    %22 = vector.load %arg8[%c0_17, %c0_18] : memref<8x128xf32, #tpu.memory_space<vmem>>, vector<8x128xf32>
    tpu.vector_store %arg8[%c0_17, %c0_18], %21 {strides = array<i32>} : memref<8x128xf32, #tpu.memory_space<vmem>>, vector<8x128xf32>,
    return
  }
  func.func @transform_0(%arg0: i32) -> (i32, i32) {
    %c0_i32 = arith.constant 0 : i32
    %c0_i32_0 = arith.constant 0 : i32
    return %arg0, %c0_i32 : i32, i32
  }
  func.func @transform_1(%arg0: i32) -> (i32, i32) {
    %c0_i32 = arith.constant 0 : i32
    %c0_i32_0 = arith.constant 0 : i32
    %c0_i32_1 = arith.constant 0 : i32
    return %c0_i32, %c0_i32_0 : i32, i32
  }
  func.func @transform_2(%arg0: i32) -> (i32, i32) {
    %c0_i32 = arith.constant 0 : i32
    %c0_i32_0 = arith.constant 0 : i32
    %c0_i32_1 = arith.constant 0 : i32
    return %c0_i32, %c0_i32_0 : i32, i32
  }
  func.func @transform_3(%arg0: i32) -> (i32, i32) {
    %c0_i32 = arith.constant 0 : i32
    %c0_i32_0 = arith.constant 0 : i32
    %c0_i32_1 = arith.constant 0 : i32
    return %c0_i32, %c0_i32_0 : i32, i32
  }
  func.func @transform_4(%arg0: i32) -> (i32, i32) {
    %c0_i32 = arith.constant 0 : i32
    %c0_i32_0 = arith.constant 0 : i32
    %c0_i32_1 = arith.constant 0 : i32
    return %c0_i32, %c0_i32_0 : i32, i32
  }
  func.func @transform_5(%arg0: i32) -> (i32, i32) {
    %c0_i32 = arith.constant 0 : i32
    %c0_i32_0 = arith.constant 0 : i32
    %c0_i32_1 = arith.constant 0 : i32
    return %c0_i32, %c0_i32_0 : i32, i32
  }
  func.func @transform_6(%arg0: i32) -> (i32, i32) {
    %c0_i32 = arith.constant 0 : i32
    %c0_i32_0 = arith.constant 0 : i32
    %c0_i32_1 = arith.constant 0 : i32
    return %c0_i32, %c0_i32_0 : i32, i32
  }
  func.func @transform_7(%arg0: i32) -> (i32, i32) {
    %c0_i32 = arith.constant 0 : i32
    %c0_i32_0 = arith.constant 0 : i32
    return %arg0, %c0_i32 : i32, i32
  }
}

</mosaic_0001>

<llo_original>
// kernel: tpu_custom_call.1
$region0: #{tpu_custom_call.1}
  #allocation0 [shape = 'u32[]', space=smem, size = 0x4, offset = 0x4, fixed_abs, tag = 'smem constant byte address 0x4 - core index']
  #allocation1 [shape = 'u32[144,128]{1,0:T(1,128)}', space=vmem, size = 0x12000, scoped, tag = 'internal scratch']
  %s0 = inlined_call_operand.hbm [shape: bf16[8,32], index: 0, kind: input, shape index: {}]
  %s1 = inlined_call_operand.hbm [shape: bf16[32,128], index: 1, kind: input, shape index: {}]
  %s2 = inlined_call_operand.vmem [shape: f32[1,128], index: 2, kind: input, shape index: {}]
  %s3 = inlined_call_operand.hbm [shape: bf16[128,128], index: 3, kind: input, shape index: {}]
  %s4 = inlined_call_operand.vmem [shape: f32[1,128], index: 4, kind: input, shape index: {}]
  %s5 = inlined_call_operand.hbm [shape: bf16[128,128], index: 5, kind: input, shape index: {}]
  %s6 = inlined_call_operand.vmem [shape: f32[1,128], index: 6, kind: input, shape index: {}]
  %s7 = inlined_call_operand.hbm [shape: f32[8,128], index: 7, kind: output, shape index: {}]
  %s8 = sld [smem:[#allocation0]]
  $region54: #{tpu_custom_call.1} parent=0
    _
  %s10 = ssub.s32 1, %s8
  %s11 = scalar_select 0, %s10, %s8
  $region1: #{tpu_custom_call.1} parent=0
    #allocation2 [shape = 'u8[2048]{0}', space=vmem, size = 0x800, scoped, tag = 'input window, operand 0, single buffered']
    #allocation3 [shape = 's32[1]{0}', space=sflag, size = 0x4, scoped, tag = 'scoped memory for tpu_custom_call.1']
    #allocation4 [shape = 's32[1]{0}', space=sflag, size = 0x4, scoped, tag = 'scoped memory for tpu_custom_call.1']
    #allocation5 [shape = 'u8[8192]{0}', space=vmem, size = 0x2000, scoped, tag = 'input window, operand 1, single buffered']
    #allocation6 [shape = 's32[1]{0}', space=sflag, size = 0x4, scoped, tag = 'scoped memory for tpu_custom_call.1']
    #allocation7 [shape = 'u8[32768]{0}', space=vmem, size = 0x8000, scoped, tag = 'input window, operand 3, single buffered']
    #allocation8 [shape = 'u8[32768]{0}', space=vmem, size = 0x8000, scoped, tag = 'input window, operand 5, single buffered']
    #allocation9 [shape = 's32[1]{0}', space=sflag, size = 0x4, scoped, tag = 'scoped memory for tpu_custom_call.1']
    #allocation10 [shape = 'u8[4096]{0}', space=vmem, size = 0x1000, scoped, tag = 'output window, operand 0, single buffered']
    %12 = vsyncpa [#allocation3], 0
    %13 = vsyncpa [#allocation6], 0
    %14 = vsyncpa [#allocation9], 0
    %15 = vsyncpa [#allocation4], 0
    // Predicated region
    $region2: #{tpu_custom_call.1} parent=1 // pred_check
      _
    $region3: #{tpu_custom_call.1} parent=1 // pred_check_branch
      %17 = sbr.rel (0) target = $region5
    $region4: #{tpu_custom_call.1} parent=1 // pred_region
      %s19 = ssub.s32 64, 64
      %20 = vsyncadd [#allocation3], %s19
      %s22 = sshll.u32 [#allocation2], 4
      %s23 = int_to_ptr.vmem [resolvable:$true] %s22
      %25 = dma.hbm_to_vmem [thread:$0]  %s0, 64, %s23, [#allocation3]
    $region5: #{tpu_custom_call.1} parent=1 // pred_fallthru
      _
    // Predicated region
    $region6: #{tpu_custom_call.1} parent=1 // pred_check
      _
    $region7: #{tpu_custom_call.1} parent=1 // pred_check_branch
      %27 = sbr.rel (0) target = $region9
    $region8: #{tpu_custom_call.1} parent=1 // pred_region
      %s29 = ssub.s32 256, 256
      %30 = vsyncadd [#allocation6], %s29
      %s31 = sshll.u32 [#allocation5], 4
      %s32 = int_to_ptr.vmem [resolvable:$true] %s31
      %37 = dma.hbm_to_vmem [thread:$0]  %s1, 256, %s32, [#allocation6], 64, 64, 4
    $region9: #{tpu_custom_call.1} parent=1 // pred_fallthru
      _
    // Predicated region
    $region10: #{tpu_custom_call.1} parent=1 // pred_check
      _
    $region11: #{tpu_custom_call.1} parent=1 // pred_check_branch
      %39 = sbr.rel (0) target = $region13
    $region12: #{tpu_custom_call.1} parent=1 // pred_region
      _
    $region13: #{tpu_custom_call.1} parent=1 // pred_fallthru
      _
    // Predicated region
    $region14: #{tpu_custom_call.1} parent=1 // pred_check
      _
    $region15: #{tpu_custom_call.1} parent=1 // pred_check_branch
      %41 = sbr.rel (0) target = $region17
    $region16: #{tpu_custom_call.1} parent=1 // pred_region
      %s43 = ssub.s32 1024, 1024
      %44 = vsyncadd [#allocation6], %s43
      %s45 = sshll.u32 [#allocation7], 4
      %s46 = int_to_ptr.vmem [resolvable:$true] %s45
      %51 = dma.hbm_to_vmem [thread:$0]  %s3, 1024, %s46, [#allocation6], 64, 64, 4
    $region17: #{tpu_custom_call.1} parent=1 // pred_fallthru
      _
    // Predicated region
    $region18: #{tpu_custom_call.1} parent=1 // pred_check
      _
    $region19: #{tpu_custom_call.1} parent=1 // pred_check_branch
      %53 = sbr.rel (0) target = $region21
    $region20: #{tpu_custom_call.1} parent=1 // pred_region
      _
    $region21: #{tpu_custom_call.1} parent=1 // pred_fallthru
      _
    // Predicated region
    $region22: #{tpu_custom_call.1} parent=1 // pred_check
      _
    $region23: #{tpu_custom_call.1} parent=1 // pred_check_branch
      %55 = sbr.rel (0) target = $region25
    $region24: #{tpu_custom_call.1} parent=1 // pred_region
      %s57 = ssub.s32 1024, 1024
      %58 = vsyncadd [#allocation9], %s57
      %s59 = sshll.u32 [#allocation8], 4
      %s60 = int_to_ptr.vmem [resolvable:$true] %s59
      %65 = dma.hbm_to_vmem [thread:$0]  %s5, 1024, %s60, [#allocation9], 64, 64, 4
    $region25: #{tpu_custom_call.1} parent=1 // pred_fallthru
      _
    // Predicated region
    $region26: #{tpu_custom_call.1} parent=1 // pred_check
      _
    $region27: #{tpu_custom_call.1} parent=1 // pred_check_branch
      %67 = sbr.rel (0) target = $region29
    $region28: #{tpu_custom_call.1} parent=1 // pred_region
      _
    $region29: #{tpu_custom_call.1} parent=1 // pred_fallthru
      _
    // Predicated region
    $region30: #{tpu_custom_call.1} parent=1 // pred_check
      _
    $region31: #{tpu_custom_call.1} parent=1 // pred_check_branch
      %69 = sbr.rel (0) target = $region33
    $region32: #{tpu_custom_call.1} parent=1 // pred_region
      %70 = dma.done [#allocation3], 64
    $region33: #{tpu_custom_call.1} parent=1 // pred_fallthru
      _
    // Predicated region
    $region34: #{tpu_custom_call.1} parent=1 // pred_check
      _
    $region35: #{tpu_custom_call.1} parent=1 // pred_check_branch
      %72 = sbr.rel (0) target = $region37
    $region36: #{tpu_custom_call.1} parent=1 // pred_region
      %73 = dma.done [#allocation6], 256
    $region37: #{tpu_custom_call.1} parent=1 // pred_fallthru
      _
    // Predicated region
    $region38: #{tpu_custom_call.1} parent=1 // pred_check
      _
    $region39: #{tpu_custom_call.1} parent=1 // pred_check_branch
      %75 = sbr.rel (0) target = $region41
    $region40: #{tpu_custom_call.1} parent=1 // pred_region
      %76 = dma.done [#allocation6], 1024
    $region41: #{tpu_custom_call.1} parent=1 // pred_fallthru
      _
    // Predicated region
    $region42: #{tpu_custom_call.1} parent=1 // pred_check
      _
    $region43: #{tpu_custom_call.1} parent=1 // pred_check_branch
      %78 = sbr.rel (0) target = $region45
    $region44: #{tpu_custom_call.1} parent=1 // pred_region
      %79 = dma.done [#allocation9], 1024
    $region45: #{tpu_custom_call.1} parent=1 // pred_fallthru
      _
    %v81 = vld [vmem:[#allocation2] sm:$0xf]
    %v82 = vld [vmem:[#allocation5] sm:$0xf]
    %v83 = vld [vmem:[#allocation5 + $0x4] sm:$0xf]
    %v84 = vld [vmem:[#allocation5 + $0x8] sm:$0xf]
    %v85 = vld [vmem:[#allocation5 + $0xc] sm:$0xf]
    %v86 = vld [vmem:[%s2] sm:$0x1]
    %v88 = vlaneseq
    %v89 = vshrl.u32 %v88, 7
    %v90 = vsub.s32 0, %v89
    %v91 = vrot.slane %v86, %v90
    %v97 = vunpack.c.l.b16 %v82
    %v98 = vunpack.c.l.b16 %v83
    %v99 = vunpack.c.l.b16 %v84
    %v100 = vunpack.c.l.b16 %v85
    %v101 = vpack.c.b16 %v98, %v97
    %v102 = vpack.c.b16 %v100, %v99
    %vm105 = vcmask 261120
    %v107 = vsel %vm105, %v81, 0
    %109 = vmatprep.subr.bf16.mxu0 0
    %110 = vmatpush1.bf16.msra.mxu0 %v101
    %111 = vmatprep.subr.bf16.mxu0 0
    %112 = vmatpush1.bf16.msra.mxu0 %v102
    %113 = vmatprep.subr.bf16.mxu0 0
    %114 = vmatpush1.bf16.msra.mxu0 0
    %115 = vmatprep.subr.bf16.mxu0 0
    %116 = vmatpush1.bf16.msra.mxu0 0
    %117 = vmatprep.subr.bf16.mxu0 0
    %118 = vmatpush1.bf16.msra.mxu0 0
    %119 = vmatprep.subr.bf16.mxu0 0
    %120 = vmatpush1.bf16.msra.mxu0 0
    %121 = vmatprep.subr.bf16.mxu0 0
    %122 = vmatpush1.bf16.msra.mxu0 0
    %123 = vmatprep.subr.bf16.mxu0 0
    %124 = vmatpush1.bf16.msra.mxu0 0
    %125 = vmatprep.subr.bf16.mxu0 0
    %126 = vmatpush1.bf16.msra.mxu0 0
    %127 = vmatprep.subr.bf16.mxu0 0
    %128 = vmatpush1.bf16.msra.mxu0 0
    %129 = vmatprep.subr.bf16.mxu0 0
    %130 = vmatpush1.bf16.msra.mxu0 0
    %131 = vmatprep.subr.bf16.mxu0 0
    %132 = vmatpush1.bf16.msra.mxu0 0
    %133 = vmatprep.subr.bf16.mxu0 0
    %134 = vmatpush1.bf16.msra.mxu0 0
    %135 = vmatprep.subr.bf16.mxu0 0
    %136 = vmatpush1.bf16.msra.mxu0 0
    %137 = vmatprep.subr.bf16.mxu0 0
    %138 = vmatpush1.bf16.msra.mxu0 0
    %139 = vmatprep.subr.bf16.mxu0 0
    %140 = vmatpush1.bf16.msra.mxu0 0
    %141 = vmatprep.mubr.bf16.mxu0 0
    %142 = vmatmul.mubr.bf16.gmra.mrb[0].mxu0 %v107
    %v143 = vpop.f32.mrb[0].mxu0
    %v144 = vadd.f32 %v91, %v143
    %v145 = vpop.f32.mrb[0].mxu0
    %v146 = vpop.f32.mrb[0].mxu0
    %v147 = vpop.f32.mrb[0].mxu0
    %148 = vdwg.mxu0
    %v149 = vmax.f32 %v144, 0.0
    %v150 = vpack.c.bf16 %v149, %v149
    %v151 = vld [vmem:[#allocation7] sm:$0xf]
    %v152 = vld [vmem:[#allocation7 + $0x4] sm:$0xf]
    %v153 = vld [vmem:[#allocation7 + $0x8] sm:$0xf]
    %v154 = vld [vmem:[#allocation7 + $0xc] sm:$0xf]
    %v155 = vld [vmem:[#allocation7 + $0x10] sm:$0xf]
    %v156 = vld [vmem:[#allocation7 + $0x14] sm:$0xf]
    %v157 = vld [vmem:[#allocation7 + $0x18] sm:$0xf]
    %v158 = vld [vmem:[#allocation7 + $0x1c] sm:$0xf]
    %v159 = vld [vmem:[#allocation7 + $0x20] sm:$0xf]
    %v160 = vld [vmem:[#allocation7 + $0x24] sm:$0xf]
    %v161 = vld [vmem:[#allocation7 + $0x28] sm:$0xf]
    %v162 = vld [vmem:[#allocation7 + $0x2c] sm:$0xf]
    %v163 = vld [vmem:[#allocation7 + $0x30] sm:$0xf]
    %v164 = vld [vmem:[#allocation7 + $0x34] sm:$0xf]
    %v165 = vld [vmem:[#allocation7 + $0x38] sm:$0xf]
    %v166 = vld [vmem:[#allocation7 + $0x3c] sm:$0xf]
    %v167 = vld [vmem:[%s4] sm:$0x1]
    %v169 = vlaneseq
    %v170 = vshrl.u32 %v169, 7
    %v171 = vsub.s32 0, %v170
    %v172 = vrot.slane %v167, %v171
    %v190 = vunpack.c.l.b16 %v151
    %v191 = vunpack.c.l.b16 %v152
    %v192 = vunpack.c.l.b16 %v153
    %v193 = vunpack.c.l.b16 %v154
    %v194 = vunpack.c.l.b16 %v155
    %v195 = vunpack.c.l.b16 %v156
    %v196 = vunpack.c.l.b16 %v157
    %v197 = vunpack.c.l.b16 %v158
    %v198 = vunpack.c.l.b16 %v159
    %v199 = vunpack.c.l.b16 %v160
    %v200 = vunpack.c.l.b16 %v161
    %v201 = vunpack.c.l.b16 %v162
    %v202 = vunpack.c.l.b16 %v163
    %v203 = vunpack.c.l.b16 %v164
    %v204 = vunpack.c.l.b16 %v165
    %v205 = vunpack.c.l.b16 %v166
    %v206 = vpack.c.b16 %v191, %v190
    %v207 = vpack.c.b16 %v193, %v192
    %v208 = vpack.c.b16 %v195, %v194
    %v209 = vpack.c.b16 %v197, %v196
    %v210 = vpack.c.b16 %v199, %v198
    %v211 = vpack.c.b16 %v201, %v200
    %v212 = vpack.c.b16 %v203, %v202
    %v213 = vpack.c.b16 %v205, %v204
    %222 = vmatprep.subr.bf16.mxu0 0
    %223 = vmatpush1.bf16.msra.mxu0 %v206
    %224 = vmatprep.subr.bf16.mxu0 0
    %225 = vmatpush1.bf16.msra.mxu0 %v207
    %226 = vmatprep.subr.bf16.mxu0 0
    %227 = vmatpush1.bf16.msra.mxu0 %v208
    %228 = vmatprep.subr.bf16.mxu0 0
    %229 = vmatpush1.bf16.msra.mxu0 %v209
    %230 = vmatprep.subr.bf16.mxu0 0
    %231 = vmatpush1.bf16.msra.mxu0 %v210
    %232 = vmatprep.subr.bf16.mxu0 0
    %233 = vmatpush1.bf16.msra.mxu0 %v211
    %234 = vmatprep.subr.bf16.mxu0 0
    %235 = vmatpush1.bf16.msra.mxu0 %v212
    %236 = vmatprep.subr.bf16.mxu0 0
    %237 = vmatpush1.bf16.msra.mxu0 %v213
    %238 = vmatprep.subr.bf16.mxu0 0
    %239 = vmatpush1.bf16.msra.mxu0 0
    %240 = vmatprep.subr.bf16.mxu0 0
    %241 = vmatpush1.bf16.msra.mxu0 0
    %242 = vmatprep.subr.bf16.mxu0 0
    %243 = vmatpush1.bf16.msra.mxu0 0
    %244 = vmatprep.subr.bf16.mxu0 0
    %245 = vmatpush1.bf16.msra.mxu0 0
    %246 = vmatprep.subr.bf16.mxu0 0
    %247 = vmatpush1.bf16.msra.mxu0 0
    %248 = vmatprep.subr.bf16.mxu0 0
    %249 = vmatpush1.bf16.msra.mxu0 0
    %250 = vmatprep.subr.bf16.mxu0 0
    %251 = vmatpush1.bf16.msra.mxu0 0
    %252 = vmatprep.subr.bf16.mxu0 0
    %253 = vmatpush1.bf16.msra.mxu0 0
    %254 = vmatprep.mubr.bf16.mxu0 0
    %255 = vmatmul.mubr.bf16.gmra.mrb[0].mxu0 %v150
    %v256 = vpop.f32.mrb[0].mxu0
    %v257 = vadd.f32 %v172, %v256
    %v258 = vpop.f32.mrb[0].mxu0
    %v259 = vpop.f32.mrb[0].mxu0
    %v260 = vpop.f32.mrb[0].mxu0
    %261 = vdwg.mxu0
    %v262 = vmax.f32 %v257, 0.0
    %v263 = vpack.c.bf16 %v262, %v262
    %v264 = vld [vmem:[#allocation8] sm:$0xf]
    %v265 = vld [vmem:[#allocation8 + $0x4] sm:$0xf]
    %v266 = vld [vmem:[#allocation8 + $0x8] sm:$0xf]
    %v267 = vld [vmem:[#allocation8 + $0xc] sm:$0xf]
    %v268 = vld [vmem:[#allocation8 + $0x10] sm:$0xf]
    %v269 = vld [vmem:[#allocation8 + $0x14] sm:$0xf]
    %v270 = vld [vmem:[#allocation8 + $0x18] sm:$0xf]
    %v271 = vld [vmem:[#allocation8 + $0x1c] sm:$0xf]
    %v272 = vld [vmem:[#allocation8 + $0x20] sm:$0xf]
    %v273 = vld [vmem:[#allocation8 + $0x24] sm:$0xf]
    %v274 = vld [vmem:[#allocation8 + $0x28] sm:$0xf]
    %v275 = vld [vmem:[#allocation8 + $0x2c] sm:$0xf]
    %v276 = vld [vmem:[#allocation8 + $0x30] sm:$0xf]
    %v277 = vld [vmem:[#allocation8 + $0x34] sm:$0xf]
    %v278 = vld [vmem:[#allocation8 + $0x38] sm:$0xf]
    %v279 = vld [vmem:[#allocation8 + $0x3c] sm:$0xf]
    %v280 = vld [vmem:[%s6] sm:$0x1]
    %v282 = vlaneseq
    %v283 = vshrl.u32 %v282, 7
    %v284 = vsub.s32 0, %v283
    %v285 = vrot.slane %v280, %v284
    %v303 = vunpack.c.l.b16 %v264
    %v304 = vunpack.c.l.b16 %v265
    %v305 = vunpack.c.l.b16 %v266
    %v306 = vunpack.c.l.b16 %v267
    %v307 = vunpack.c.l.b16 %v268
    %v308 = vunpack.c.l.b16 %v269
    %v309 = vunpack.c.l.b16 %v270
    %v310 = vunpack.c.l.b16 %v271
    %v311 = vunpack.c.l.b16 %v272
    %v312 = vunpack.c.l.b16 %v273
    %v313 = vunpack.c.l.b16 %v274
    %v314 = vunpack.c.l.b16 %v275
    %v315 = vunpack.c.l.b16 %v276
    %v316 = vunpack.c.l.b16 %v277
    %v317 = vunpack.c.l.b16 %v278
    %v318 = vunpack.c.l.b16 %v279
    %v319 = vpack.c.b16 %v304, %v303
    %v320 = vpack.c.b16 %v306, %v305
    %v321 = vpack.c.b16 %v308, %v307
    %v322 = vpack.c.b16 %v310, %v309
    %v323 = vpack.c.b16 %v312, %v311
    %v324 = vpack.c.b16 %v314, %v313
    %v325 = vpack.c.b16 %v316, %v315
    %v326 = vpack.c.b16 %v318, %v317
    %335 = vmatprep.subr.bf16.mxu0 0
    %336 = vmatpush1.bf16.msra.mxu0 %v319
    %337 = vmatprep.subr.bf16.mxu0 0
    %338 = vmatpush1.bf16.msra.mxu0 %v320
    %339 = vmatprep.subr.bf16.mxu0 0
    %340 = vmatpush1.bf16.msra.mxu0 %v321
    %341 = vmatprep.subr.bf16.mxu0 0
    %342 = vmatpush1.bf16.msra.mxu0 %v322
    %343 = vmatprep.subr.bf16.mxu0 0
    %344 = vmatpush1.bf16.msra.mxu0 %v323
    %345 = vmatprep.subr.bf16.mxu0 0
    %346 = vmatpush1.bf16.msra.mxu0 %v324
    %347 = vmatprep.subr.bf16.mxu0 0
    %348 = vmatpush1.bf16.msra.mxu0 %v325
    %349 = vmatprep.subr.bf16.mxu0 0
    %350 = vmatpush1.bf16.msra.mxu0 %v326
    %351 = vmatprep.subr.bf16.mxu0 0
    %352 = vmatpush1.bf16.msra.mxu0 0
    %353 = vmatprep.subr.bf16.mxu0 0
    %354 = vmatpush1.bf16.msra.mxu0 0
    %355 = vmatprep.subr.bf16.mxu0 0
    %356 = vmatpush1.bf16.msra.mxu0 0
    %357 = vmatprep.subr.bf16.mxu0 0
    %358 = vmatpush1.bf16.msra.mxu0 0
    %359 = vmatprep.subr.bf16.mxu0 0
    %360 = vmatpush1.bf16.msra.mxu0 0
    %361 = vmatprep.subr.bf16.mxu0 0
    %362 = vmatpush1.bf16.msra.mxu0 0
    %363 = vmatprep.subr.bf16.mxu0 0
    %364 = vmatpush1.bf16.msra.mxu0 0
    %365 = vmatprep.subr.bf16.mxu0 0
    %366 = vmatpush1.bf16.msra.mxu0 0
    %367 = vmatprep.mubr.bf16.mxu0 0
    %368 = vmatmul.mubr.bf16.gmra.mrb[0].mxu0 %v263
    %v369 = vpop.f32.mrb[0].mxu0
    %v370 = vadd.f32 %v285, %v369
    %v371 = vpop.f32.mrb[0].mxu0
    %v372 = vpop.f32.mrb[0].mxu0
    %v373 = vpop.f32.mrb[0].mxu0
    %374 = vdwg.mxu0
    %375 = vst [vmem:[#allocation10] sm:$0xff] %v370
    // Predicated region
    $region46: #{tpu_custom_call.1} parent=1 // pred_check
      _
    $region47: #{tpu_custom_call.1} parent=1 // pred_check_branch
      %377 = sbr.rel (0) target = $region49
    $region48: #{tpu_custom_call.1} parent=1 // pred_region
      %s379 = ssub.s32 128, 128
      %380 = vsyncadd [#allocation4], %s379
      %s382 = sshll.u32 [#allocation10], 4
      %s383 = int_to_ptr.vmem [resolvable:$true] %s382
      %385 = dma.vmem_to_hbm [thread:$0]  %s383, 128, %s7, [#allocation4]
    $region49: #{tpu_custom_call.1} parent=1 // pred_fallthru
      _
    // Predicated region
    $region50: #{tpu_custom_call.1} parent=1 // pred_check
      _
    $region51: #{tpu_custom_call.1} parent=1 // pred_check_branch
      %387 = sbr.rel (0) target = $region53
    $region52: #{tpu_custom_call.1} parent=1 // pred_region
      %388 = dma.done [#allocation4], 128
    $region53: #{tpu_custom_call.1} parent=1 // pred_fallthru
      _
    %389 = vsyncpa [#allocation3], 1
    %390 = vsyncpa [#allocation6], 1
    %391 = vsyncpa [#allocation9], 1
    %392 = vsyncpa [#allocation4], 1

// kernel: tpu_custom_call.1
$region0: #{tpu_custom_call.1}
  #allocation0 [shape = 'u32[]', space=smem, size = 0x4, offset = 0x4, fixed_abs, tag = 'smem constant byte address 0x4 - core index']
  #allocation1 [shape = 'u32[144,128]{1,0:T(1,128)}', space=vmem, size = 0x12000, scoped, tag = 'internal scratch']
  %s0 = inlined_call_operand.hbm [shape: bf16[8,32], index: 0, kind: input, shape index: {}]
  %s1 = inlined_call_operand.hbm [shape: bf16[32,128], index: 1, kind: input, shape index: {}]
  %s2 = inlined_call_operand.vmem [shape: f32[1,128], index: 2, kind: input, shape index: {}]
  %s3 = inlined_call_operand.hbm [shape: bf16[128,128], index: 3, kind: input, shape index: {}]
  %s4 = inlined_call_operand.vmem [shape: f32[1,128], index: 4, kind: input, shape index: {}]
  %s5 = inlined_call_operand.hbm [shape: bf16[128,128], index: 5, kind: input, shape index: {}]
  %s6 = inlined_call_operand.vmem [shape: f32[1,128], index: 6, kind: input, shape index: {}]
  %s7 = inlined_call_operand.hbm [shape: f32[8,128], index: 7, kind: output, shape index: {}]
  %s8 = sld [smem:[#allocation0]]
  $region54: #{tpu_custom_call.1} parent=0
    _
  %s10 = ssub.s32 1, %s8
  %s11 = scalar_select 0, %s10, %s8
  $region1: #{tpu_custom_call.1} parent=0
    #allocation2 [shape = 'u8[2048]{0}', space=vmem, size = 0x800, scoped, tag = 'input window, operand 0, single buffered']
    #allocation3 [shape = 's32[1]{0}', space=sflag, size = 0x4, scoped, tag = 'scoped memory for tpu_custom_call.1']
    #allocation4 [shape = 's32[1]{0}', space=sflag, size = 0x4, scoped, tag = 'scoped memory for tpu_custom_call.1']
    #allocation5 [shape = 'u8[8192]{0}', space=vmem, size = 0x2000, scoped, tag = 'input window, operand 1, single buffered']
    #allocation6 [shape = 's32[1]{0}', space=sflag, size = 0x4, scoped, tag = 'scoped memory for tpu_custom_call.1']
    #allocation7 [shape = 'u8[32768]{0}', space=vmem, size = 0x8000, scoped, tag = 'input window, operand 3, single buffered']
    #allocation8 [shape = 'u8[32768]{0}', space=vmem, size = 0x8000, scoped, tag = 'input window, operand 5, single buffered']
    #allocation9 [shape = 's32[1]{0}', space=sflag, size = 0x4, scoped, tag = 'scoped memory for tpu_custom_call.1']
    #allocation10 [shape = 'u8[4096]{0}', space=vmem, size = 0x1000, scoped, tag = 'output window, operand 0, single buffered']
    %12 = vsyncpa [#allocation3], 0
    %13 = vsyncpa [#allocation6], 0
    %14 = vsyncpa [#allocation9], 0
    %15 = vsyncpa [#allocation4], 0
    // Predicated region
    $region2: #{tpu_custom_call.1} parent=1 // pred_check
      _
    $region3: #{tpu_custom_call.1} parent=1 // pred_check_branch
      %17 = sbr.rel (0) target = $region5
    $region4: #{tpu_custom_call.1} parent=1 // pred_region
      %s19 = ssub.s32 64, 64
      %20 = vsyncadd [#allocation3], %s19
      %s22 = sshll.u32 [#allocation2], 4
      %s23 = int_to_ptr.vmem [resolvable:$true] %s22
      %25 = dma.hbm_to_vmem [thread:$0]  %s0, 64, %s23, [#allocation3]
    $region5: #{tpu_custom_call.1} parent=1 // pred_fallthru
      _
    // Predicated region
    $region6: #{tpu_custom_call.1} parent=1 // pred_check
      _
    $region7: #{tpu_custom_call.1} parent=1 // pred_check_branch
      %27 = sbr.rel (0) target = $region9
    $region8: #{tpu_custom_call.1} parent=1 // pred_region
      %s29 = ssub.s32 256, 256
      %30 = vsyncadd [#allocation6], %s29
      %s31 = sshll.u32 [#allocation5], 4
      %s32 = int_to_ptr.vmem [resolvable:$true] %s31
      %37 = dma.hbm_to_vmem [thread:$0]  %s1, 256, %s32, [#allocation6], 64, 64, 4
    $region9: #{tpu_custom_call.1} parent=1 // pred_fallthru
      _
    // Predicated region
    $region10: #{tpu_custom_call.1} parent=1 // pred_check
      _
    $region11: #{tpu_custom_call.1} parent=1 // pred_check_branch
      %39 = sbr.rel (0) target = $region13
    $region12: #{tpu_custom_call.1} parent=1 // pred_region
      _
    $region13: #{tpu_custom_call.1} parent=1 // pred_fallthru
      _
    // Predicated region
    $region14: #{tpu_custom_call.1} parent=1 // pred_check
      _
    $region15: #{tpu_custom_call.1} parent=1 // pred_check_branch
      %41 = sbr.rel (0) target = $region17
    $region16: #{tpu_custom_call.1} parent=1 // pred_region
      %s43 = ssub.s32 1024, 1024
      %44 = vsyncadd [#allocation6], %s43
      %s45 = sshll.u32 [#allocation7], 4
      %s46 = int_to_ptr.vmem [resolvable:$true] %s45
      %51 = dma.hbm_to_vmem [thread:$0]  %s3, 1024, %s46, [#allocation6], 64, 64, 4
    $region17: #{tpu_custom_call.1} parent=1 // pred_fallthru
      _
    // Predicated region
    $region18: #{tpu_custom_call.1} parent=1 // pred_check
      _
    $region19: #{tpu_custom_call.1} parent=1 // pred_check_branch
      %53 = sbr.rel (0) target = $region21
    $region20: #{tpu_custom_call.1} parent=1 // pred_region
      _
    $region21: #{tpu_custom_call.1} parent=1 // pred_fallthru
      _
    // Predicated region
    $region22: #{tpu_custom_call.1} parent=1 // pred_check
      _
    $region23: #{tpu_custom_call.1} parent=1 // pred_check_branch
      %55 = sbr.rel (0) target = $region25
    $region24: #{tpu_custom_call.1} parent=1 // pred_region
      %s57 = ssub.s32 1024, 1024
      %58 = vsyncadd [#allocation9], %s57
      %s59 = sshll.u32 [#allocation8], 4
      %s60 = int_to_ptr.vmem [resolvable:$true] %s59
      %65 = dma.hbm_to_vmem [thread:$0]  %s5, 1024, %s60, [#allocation9], 64, 64, 4
    $region25: #{tpu_custom_call.1} parent=1 // pred_fallthru
      _
    // Predicated region
    $region26: #{tpu_custom_call.1} parent=1 // pred_check
      _
    $region27: #{tpu_custom_call.1} parent=1 // pred_check_branch
      %67 = sbr.rel (0) target = $region29
    $region28: #{tpu_custom_call.1} parent=1 // pred_region
      _
    $region29: #{tpu_custom_call.1} parent=1 // pred_fallthru
      _
    // Predicated region
    $region30: #{tpu_custom_call.1} parent=1 // pred_check
      _
    $region31: #{tpu_custom_call.1} parent=1 // pred_check_branch
      %69 = sbr.rel (0) target = $region33
    $region32: #{tpu_custom_call.1} parent=1 // pred_region
      %70 = dma.done [#allocation3], 64
    $region33: #{tpu_custom_call.1} parent=1 // pred_fallthru
      _
    // Predicated region
    $region34: #{tpu_custom_call.1} parent=1 // pred_check
      _
    $region35: #{tpu_custom_call.1} parent=1 // pred_check_branch
      %72 = sbr.rel (0) target = $region37
    $region36: #{tpu_custom_call.1} parent=1 // pred_region
      %73 = dma.done [#allocation6], 256
    $region37: #{tpu_custom_call.1} parent=1 // pred_fallthru
      _
    // Predicated region
    $region38: #{tpu_custom_call.1} parent=1 // pred_check
      _
    $region39: #{tpu_custom_call.1} parent=1 // pred_check_branch
      %75 = sbr.rel (0) target = $region41
    $region40: #{tpu_custom_call.1} parent=1 // pred_region
      %76 = dma.done [#allocation6], 1024
    $region41: #{tpu_custom_call.1} parent=1 // pred_fallthru
      _
    // Predicated region
    $region42: #{tpu_custom_call.1} parent=1 // pred_check
      _
    $region43: #{tpu_custom_call.1} parent=1 // pred_check_branch
      %78 = sbr.rel (0) target = $region45
    $region44: #{tpu_custom_call.1} parent=1 // pred_region
      %79 = dma.done [#allocation9], 1024
    $region45: #{tpu_custom_call.1} parent=1 // pred_fallthru
      _
    %v81 = vld [vmem:[#allocation2] sm:$0xf]
    %v82 = vld [vmem:[#allocation5] sm:$0xf]
    %v83 = vld [vmem:[#allocation5 + $0x4] sm:$0xf]
    %v84 = vld [vmem:[#allocation5 + $0x8] sm:$0xf]
    %v85 = vld [vmem:[#allocation5 + $0xc] sm:$0xf]
    %v86 = vld [vmem:[%s2] sm:$0x1]
    %v88 = vlaneseq
    %v89 = vshrl.u32 %v88, 7
    %v90 = vsub.s32 0, %v89
    %v91 = vrot.slane %v86, %v90
    %v97 = vunpack.c.l.b16 %v82
    %v98 = vunpack.c.l.b16 %v83
    %v99 = vunpack.c.l.b16 %v84
    %v100 = vunpack.c.l.b16 %v85
    %v101 = vpack.c.b16 %v98, %v97
    %v102 = vpack.c.b16 %v100, %v99
    %vm105 = vcmask 261120
    %v107 = vsel %vm105, %v81, 0
    %109 = vmatprep.subr.bf16.mxu0 0
    %110 = vmatpush1.bf16.msra.mxu0 %v101
    %111 = vmatprep.subr.bf16.mxu0 0
    %112 = vmatpush1.bf16.msra.mxu0 %v102
    %113 = vmatprep.subr.bf16.mxu0 0
    %114 = vmatpush1.bf16.msra.mxu0 0
    %115 = vmatprep.subr.bf16.mxu0 0
    %116 = vmatpush1.bf16.msra.mxu0 0
    %117 = vmatprep.subr.bf16.mxu0 0
    %118 = vmatpush1.bf16.msra.mxu0 0
    %119 = vmatprep.subr.bf16.mxu0 0
    %120 = vmatpush1.bf16.msra.mxu0 0
    %121 = vmatprep.subr.bf16.mxu0 0
    %122 = vmatpush1.bf16.msra.mxu0 0
    %123 = vmatprep.subr.bf16.mxu0 0
    %124 = vmatpush1.bf16.msra.mxu0 0
    %125 = vmatprep.subr.bf16.mxu0 0
    %126 = vmatpush1.bf16.msra.mxu0 0
    %127 = vmatprep.subr.bf16.mxu0 0
    %128 = vmatpush1.bf16.msra.mxu0 0
    %129 = vmatprep.subr.bf16.mxu0 0
    %130 = vmatpush1.bf16.msra.mxu0 0
    %131 = vmatprep.subr.bf16.mxu0 0
    %132 = vmatpush1.bf16.msra.mxu0 0
    %133 = vmatprep.subr.bf16.mxu0 0
    %134 = vmatpush1.bf16.msra.mxu0 0
    %135 = vmatprep.subr.bf16.mxu0 0
    %136 = vmatpush1.bf16.msra.mxu0 0
    %137 = vmatprep.subr.bf16.mxu0 0
    %138 = vmatpush1.bf16.msra.mxu0 0
    %139 = vmatprep.subr.bf16.mxu0 0
    %140 = vmatpush1.bf16.msra.mxu0 0
    %141 = vmatprep.mubr.bf16.mxu0 0
    %142 = vmatmul.mubr.bf16.gmra.mrb[0].mxu0 %v107
    %v143 = vpop.f32.mrb[0].mxu0
    %v144 = vadd.f32 %v91, %v143
    %v145 = vpop.f32.mrb[0].mxu0
    %v146 = vpop.f32.mrb[0].mxu0
    %v147 = vpop.f32.mrb[0].mxu0
    %148 = vdwg.mxu0
    %v149 = vmax.f32 %v144, 0.0
    %v150 = vpack.c.bf16 %v149, %v149
    %v151 = vld [vmem:[#allocation7] sm:$0xf]
    %v152 = vld [vmem:[#allocation7 + $0x4] sm:$0xf]
    %v153 = vld [vmem:[#allocation7 + $0x8] sm:$0xf]
    %v154 = vld [vmem:[#allocation7 + $0xc] sm:$0xf]
    %v155 = vld [vmem:[#allocation7 + $0x10] sm:$0xf]
    %v156 = vld [vmem:[#allocation7 + $0x14] sm:$0xf]
    %v157 = vld [vmem:[#allocation7 + $0x18] sm:$0xf]
    %v158 = vld [vmem:[#allocation7 + $0x1c] sm:$0xf]
    %v159 = vld [vmem:[#allocation7 + $0x20] sm:$0xf]
    %v160 = vld [vmem:[#allocation7 + $0x24] sm:$0xf]
    %v161 = vld [vmem:[#allocation7 + $0x28] sm:$0xf]
    %v162 = vld [vmem:[#allocation7 + $0x2c] sm:$0xf]
    %v163 = vld [vmem:[#allocation7 + $0x30] sm:$0xf]
    %v164 = vld [vmem:[#allocation7 + $0x34] sm:$0xf]
    %v165 = vld [vmem:[#allocation7 + $0x38] sm:$0xf]
    %v166 = vld [vmem:[#allocation7 + $0x3c] sm:$0xf]
    %v167 = vld [vmem:[%s4] sm:$0x1]
    %v169 = vlaneseq
    %v170 = vshrl.u32 %v169, 7
    %v171 = vsub.s32 0, %v170
    %v172 = vrot.slane %v167, %v171
    %v190 = vunpack.c.l.b16 %v151
    %v191 = vunpack.c.l.b16 %v152
    %v192 = vunpack.c.l.b16 %v153
    %v193 = vunpack.c.l.b16 %v154
    %v194 = vunpack.c.l.b16 %v155
    %v195 = vunpack.c.l.b16 %v156
    %v196 = vunpack.c.l.b16 %v157
    %v197 = vunpack.c.l.b16 %v158
    %v198 = vunpack.c.l.b16 %v159
    %v199 = vunpack.c.l.b16 %v160
    %v200 = vunpack.c.l.b16 %v161
    %v201 = vunpack.c.l.b16 %v162
    %v202 = vunpack.c.l.b16 %v163
    %v203 = vunpack.c.l.b16 %v164
    %v204 = vunpack.c.l.b16 %v165
    %v205 = vunpack.c.l.b16 %v166
    %v206 = vpack.c.b16 %v191, %v190
    %v207 = vpack.c.b16 %v193, %v192
    %v208 = vpack.c.b16 %v195, %v194
    %v209 = vpack.c.b16 %v197, %v196
    %v210 = vpack.c.b16 %v199, %v198
    %v211 = vpack.c.b16 %v201, %v200
    %v212 = vpack.c.b16 %v203, %v202
    %v213 = vpack.c.b16 %v205, %v204
    %222 = vmatprep.subr.bf16.mxu0 0
    %223 = vmatpush1.bf16.msra.mxu0 %v206
    %224 = vmatprep.subr.bf16.mxu0 0
    %225 = vmatpush1.bf16.msra.mxu0 %v207
    %226 = vmatprep.subr.bf16.mxu0 0
    %227 = vmatpush1.bf16.msra.mxu0 %v208
    %228 = vmatprep.subr.bf16.mxu0 0
    %229 = vmatpush1.bf16.msra.mxu0 %v209
    %230 = vmatprep.subr.bf16.mxu0 0
    %231 = vmatpush1.bf16.msra.mxu0 %v210
    %232 = vmatprep.subr.bf16.mxu0 0
    %233 = vmatpush1.bf16.msra.mxu0 %v211
    %234 = vmatprep.subr.bf16.mxu0 0
    %235 = vmatpush1.bf16.msra.mxu0 %v212
    %236 = vmatprep.subr.bf16.mxu0 0
    %237 = vmatpush1.bf16.msra.mxu0 %v213
    %238 = vmatprep.subr.bf16.mxu0 0
    %239 = vmatpush1.bf16.msra.mxu0 0
    %240 = vmatprep.subr.bf16.mxu0 0
    %241 = vmatpush1.bf16.msra.mxu0 0
    %242 = vmatprep.subr.bf16.mxu0 0
    %243 = vmatpush1.bf16.msra.mxu0 0
    %244 = vmatprep.subr.bf16.mxu0 0
    %245 = vmatpush1.bf16.msra.mxu0 0
    %246 = vmatprep.subr.bf16.mxu0 0
    %247 = vmatpush1.bf16.msra.mxu0 0
    %248 = vmatprep.subr.bf16.mxu0 0
    %249 = vmatpush1.bf16.msra.mxu0 0
    %250 = vmatprep.subr.bf16.mxu0 0
    %251 = vmatpush1.bf16.msra.mxu0 0
    %252 = vmatprep.subr.bf16.mxu0 0
    %253 = vmatpush1.bf16.msra.mxu0 0
    %254 = vmatprep.mubr.bf16.mxu0 0
    %255 = vmatmul.mubr.bf16.gmra.mrb[0].mxu0 %v150
    %v256 = vpop.f32.mrb[0].mxu0
    %v257 = vadd.f32 %v172, %v256
    %v258 = vpop.f32.mrb[0].mxu0
    %v259 = vpop.f32.mrb[0].mxu0
    %v260 = vpop.f32.mrb[0].mxu0
    %261 = vdwg.mxu0
    %v262 = vmax.f32 %v257, 0.0
    %v263 = vpack.c.bf16 %v262, %v262
    %v264 = vld [vmem:[#allocation8] sm:$0xf]
    %v265 = vld [vmem:[#allocation8 + $0x4] sm:$0xf]
    %v266 = vld [vmem:[#allocation8 + $0x8] sm:$0xf]
    %v267 = vld [vmem:[#allocation8 + $0xc] sm:$0xf]
    %v268 = vld [vmem:[#allocation8 + $0x10] sm:$0xf]
    %v269 = vld [vmem:[#allocation8 + $0x14] sm:$0xf]
    %v270 = vld [vmem:[#allocation8 + $0x18] sm:$0xf]
    %v271 = vld [vmem:[#allocation8 + $0x1c] sm:$0xf]
    %v272 = vld [vmem:[#allocation8 + $0x20] sm:$0xf]
    %v273 = vld [vmem:[#allocation8 + $0x24] sm:$0xf]
    %v274 = vld [vmem:[#allocation8 + $0x28] sm:$0xf]
    %v275 = vld [vmem:[#allocation8 + $0x2c] sm:$0xf]
    %v276 = vld [vmem:[#allocation8 + $0x30] sm:$0xf]
    %v277 = vld [vmem:[#allocation8 + $0x34] sm:$0xf]
    %v278 = vld [vmem:[#allocation8 + $0x38] sm:$0xf]
    %v279 = vld [vmem:[#allocation8 + $0x3c] sm:$0xf]
    %v280 = vld [vmem:[%s6] sm:$0x1]
    %v282 = vlaneseq
    %v283 = vshrl.u32 %v282, 7
    %v284 = vsub.s32 0, %v283
    %v285 = vrot.slane %v280, %v284
    %v303 = vunpack.c.l.b16 %v264
    %v304 = vunpack.c.l.b16 %v265
    %v305 = vunpack.c.l.b16 %v266
    %v306 = vunpack.c.l.b16 %v267
    %v307 = vunpack.c.l.b16 %v268
    %v308 = vunpack.c.l.b16 %v269
    %v309 = vunpack.c.l.b16 %v270
    %v310 = vunpack.c.l.b16 %v271
    %v311 = vunpack.c.l.b16 %v272
    %v312 = vunpack.c.l.b16 %v273
    %v313 = vunpack.c.l.b16 %v274
    %v314 = vunpack.c.l.b16 %v275
    %v315 = vunpack.c.l.b16 %v276
    %v316 = vunpack.c.l.b16 %v277
    %v317 = vunpack.c.l.b16 %v278
    %v318 = vunpack.c.l.b16 %v279
    %v319 = vpack.c.b16 %v304, %v303
    %v320 = vpack.c.b16 %v306, %v305
    %v321 = vpack.c.b16 %v308, %v307
    %v322 = vpack.c.b16 %v310, %v309
    %v323 = vpack.c.b16 %v312, %v311
    %v324 = vpack.c.b16 %v314, %v313
    %v325 = vpack.c.b16 %v316, %v315
    %v326 = vpack.c.b16 %v318, %v317
    %335 = vmatprep.subr.bf16.mxu0 0
    %336 = vmatpush1.bf16.msra.mxu0 %v319
    %337 = vmatprep.subr.bf16.mxu0 0
    %338 = vmatpush1.bf16.msra.mxu0 %v320
    %339 = vmatprep.subr.bf16.mxu0 0
    %340 = vmatpush1.bf16.msra.mxu0 %v321
    %341 = vmatprep.subr.bf16.mxu0 0
    %342 = vmatpush1.bf16.msra.mxu0 %v322
    %343 = vmatprep.subr.bf16.mxu0 0
    %344 = vmatpush1.bf16.msra.mxu0 %v323
    %345 = vmatprep.subr.bf16.mxu0 0
    %346 = vmatpush1.bf16.msra.mxu0 %v324
    %347 = vmatprep.subr.bf16.mxu0 0
    %348 = vmatpush1.bf16.msra.mxu0 %v325
    %349 = vmatprep.subr.bf16.mxu0 0
    %350 = vmatpush1.bf16.msra.mxu0 %v326
    %351 = vmatprep.subr.bf16.mxu0 0
    %352 = vmatpush1.bf16.msra.mxu0 0
    %353 = vmatprep.subr.bf16.mxu0 0
    %354 = vmatpush1.bf16.msra.mxu0 0
    %355 = vmatprep.subr.bf16.mxu0 0
    %356 = vmatpush1.bf16.msra.mxu0 0
    %357 = vmatprep.subr.bf16.mxu0 0
    %358 = vmatpush1.bf16.msra.mxu0 0
    %359 = vmatprep.subr.bf16.mxu0 0
    %360 = vmatpush1.bf16.msra.mxu0 0
    %361 = vmatprep.subr.bf16.mxu0 0
    %362 = vmatpush1.bf16.msra.mxu0 0
    %363 = vmatprep.subr.bf16.mxu0 0
    %364 = vmatpush1.bf16.msra.mxu0 0
    %365 = vmatprep.subr.bf16.mxu0 0
    %366 = vmatpush1.bf16.msra.mxu0 0
    %367 = vmatprep.mubr.bf16.mxu0 0
    %368 = vmatmul.mubr.bf16.gmra.mrb[0].mxu0 %v263
    %v369 = vpop.f32.mrb[0].mxu0
    %v370 = vadd.f32 %v285, %v369
    %v371 = vpop.f32.mrb[0].mxu0
    %v372 = vpop.f32.mrb[0].mxu0
    %v373 = vpop.f32.mrb[0].mxu0
    %374 = vdwg.mxu0
    %375 = vst [vmem:[#allocation10] sm:$0xff] %v370
    // Predicated region
    $region46: #{tpu_custom_call.1} parent=1 // pred_check
      _
    $region47: #{tpu_custom_call.1} parent=1 // pred_check_branch
      %377 = sbr.rel (0) target = $region49
    $region48: #{tpu_custom_call.1} parent=1 // pred_region
      %s379 = ssub.s32 128, 128
      %380 = vsyncadd [#allocation4], %s379
      %s382 = sshll.u32 [#allocation10], 4
      %s383 = int_to_ptr.vmem [resolvable:$true] %s382
      %385 = dma.vmem_to_hbm [thread:$0]  %s383, 128, %s7, [#allocation4]
    $region49: #{tpu_custom_call.1} parent=1 // pred_fallthru
      _
    // Predicated region
    $region50: #{tpu_custom_call.1} parent=1 // pred_check
      _
    $region51: #{tpu_custom_call.1} parent=1 // pred_check_branch
      %387 = sbr.rel (0) target = $region53
    $region52: #{tpu_custom_call.1} parent=1 // pred_region
      %388 = dma.done [#allocation4], 128
    $region53: #{tpu_custom_call.1} parent=1 // pred_fallthru
      _
    %389 = vsyncpa [#allocation3], 1
    %390 = vsyncpa [#allocation6], 1
    %391 = vsyncpa [#allocation9], 1
    %392 = vsyncpa [#allocation4], 1

</llo_original>
